<compile_context>
chip_gen: v6e
topology: v6e:2x2x1
jax: 0.10.0
libtpu: 0.0.40
codegen_flags: <defaults>
</compile_context>

<pallas_src>
import jax
import jax.numpy as jnp
import numpy as np
from jax.experimental import pallas as pl
from jax.experimental.pallas import tpu as pltpu

# ---- small synthetic dimensions -------------------------------------------
B = 2            # batch
CIN = 4          # input channels
H = W = 16       # spatial
KH = KW = 3      # conv kernel
COUT = 32        # fe_out_planes of the synthetic backbone
FEAT = 32        # feat_dim
C8 = FEAT // 8   # attention bottleneck width
DROPRATE = 0.5

M_CONV = B * H * W           # 512 conv-output rows (valid positions only, both samples)
K_REAL = KH * KW * CIN       # 36  real contraction depth of the fused conv matmul
K_PAD = 48                   # padded to a multiple of 16 (bf16 tile); zero lanes/rows contract to 0
OUT_PAD = 128                # lane-dense padded head width (only cols 0:6 are real)

# packed bf16 weight buffer row offsets (all multiples of 16 -> clean bf16 (16,128) tiling)
CONV_R0 = 0                  # rows k*CIN + c hold W_k[c, :]   (36 used of 48)
FE_R0 = CONV_R0 + K_PAD      # 48:  wfe (COUT, FEAT)
ATT_R0 = FE_R0 + COUT        # 80:  fused wg|wtheta|wphi (FEAT, 3*C8)
WW_R0 = ATT_R0 + FEAT        # 112: attention W (C8, FEAT), 4 rows used of 16
HEAD_R0 = WW_R0 + 16         # 128: fused head (FEAT, OUT_PAD), cols 0:6 real
WMAT_ROWS = HEAD_R0 + FEAT   # 160


# ---------------------------------------------------------------------------
# Pallas kernel: one gridless invocation, whole batch, everything in VMEM.
# ---------------------------------------------------------------------------
def atloc_kernel(patch_ref, wmat_ref, pmask_ref, dmask_ref, out_ref):
    f32 = jnp.float32
    bf16 = jnp.bfloat16

    # --- conv3x3 (pad=1): ONE fused bf16 matmul for all 9 taps & both samples
    wconv = wmat_ref[CONV_R0:CONV_R0 + K_PAD, 0:COUT]                     # (48, 32)
    conv = jnp.dot(patch_ref[...], wconv, preferred_element_type=f32)     # (512, 32)
    conv = jnp.maximum(conv, 0.0)                                         # ReLU (f32)

    # --- AdaptiveAvgPool2d(1): block-diagonal constant-mask matmul on the MXU
    # pmask[b, l] = 1/(H*W) for rows of sample b, else 0  ->  per-sample mean.
    pooled = jnp.dot(pmask_ref[...], conv.astype(bf16),
                     preferred_element_type=f32)                          # (B, COUT)

    # --- backbone fc -> feat_dim, then the F.relu in AtLoc.forward ----------
    wfe = wmat_ref[FE_R0:FE_R0 + COUT, 0:FEAT]
    feat = jnp.dot(pooled.astype(bf16), wfe, preferred_element_type=f32)
    feat = jnp.maximum(feat, 0.0)                                         # (B, FEAT)

    # --- AttentionBlock: fused g|theta|phi projection ------------------------
    watt = wmat_ref[ATT_R0:ATT_R0 + FEAT, 0:3 * C8]
    proj = jnp.dot(feat.astype(bf16), watt, preferred_element_type=f32)   # (B, 3*C8)
    gx = proj[:, 0:C8]
    th = proj[:, C8:2 * C8]
    ph = proj[:, 2 * C8:3 * C8]

    # Rank-1 attention kept strictly 2-D: for each output index i,
    #   y[:, i] = softmax_j(ph[:, i] * th[:, j]) . g[:, j]
    # Everything is a (B, C8) = (2, 4) tile; no 3-D broadcast relayouts.
    y_cols = []
    for i in range(C8):                                                   # static unroll, C8 = 4
        lo = ph[:, i:i + 1] * th                                          # (B, C8)
        e = jnp.exp(lo - jnp.max(lo, axis=-1, keepdims=True))
        num = jnp.sum(e * gx, axis=-1, keepdims=True)                     # (B, 1)
        den = jnp.sum(e, axis=-1, keepdims=True)
        y_cols.append(num / den)
    y = jnp.concatenate(y_cols, axis=1)                                   # (B, C8)

    ww = wmat_ref[WW_R0:WW_R0 + C8, 0:FEAT]
    z = jnp.dot(y.astype(bf16), ww, preferred_element_type=f32) + feat    # residual

    # --- dropout (precomputed deterministic inverted mask) ------------------
    z = z * dmask_ref[...]

    # --- fused lane-dense head: cols 0:3 = fc_xyz, cols 3:6 = fc_wpqr --------
    whead = wmat_ref[HEAD_R0:HEAD_R0 + FEAT, 0:OUT_PAD]
    out = jnp.dot(z.astype(bf16), whead, preferred_element_type=f32)      # (B, 128)
    out_ref[...] = out.astype(out_ref.dtype)


# ---------------------------------------------------------------------------
# Glue: patch layout, parameter packing, pallas_call wrapper, JAX reference
# ---------------------------------------------------------------------------
def _build_patches(x):
    """(B, CIN, H, W) NCHW -> 3x3 im2col patches (B*H*W, K_PAD) bf16.

    Pure layout plumbing (no compute), done once in the wrapper and fused by
    XLA with the input prep; lane index = k*CIN + c matches the packed conv
    weight rows, and only *valid* output positions are emitted (no junk rows).
    """
    xp = jnp.pad(x, ((0, 0), (0, 0), (1, 1), (1, 1)))            # (B, CIN, H+2, W+2)
    xn = jnp.transpose(xp, (0, 2, 3, 1))                          # (B, H+2, W+2, CIN)
    wins = [xn[:, dy:dy + H, dx:dx + W, :]                        # 9 shifted windows
            for dy in range(KH) for dx in range(KW)]
    p = jnp.stack(wins, axis=3).reshape(B * H * W, K_REAL)        # (512, 36)
    p = jnp.pad(p, ((0, 0), (0, K_PAD - K_REAL)))                 # (512, 48)
    return p.astype(jnp.bfloat16)


def build_pool_mask():
    m = np.zeros((B, M_CONV), np.float32)
    for b in range(B):
        m[b, b * H * W:(b + 1) * H * W] = 1.0 / (H * W)           # 1/256 is exact in bf16
    return jnp.asarray(m, dtype=jnp.bfloat16)                     # (B, B*H*W)


def pack_params(wconv_k, wfe, watt, ww, whead6):
    wmat = jnp.zeros((WMAT_ROWS, 128), jnp.float32)
    wmat = wmat.at[CONV_R0:CONV_R0 + K_REAL, 0:COUT].set(
        wconv_k.reshape(K_REAL, COUT))                            # row k*CIN + c
    wmat = wmat.at[FE_R0:FE_R0 + COUT, 0:FEAT].set(wfe)
    wmat = wmat.at[ATT_R0:ATT_R0 + FEAT, 0:3 * C8].set(watt)
    wmat = wmat.at[WW_R0:WW_R0 + C8, 0:FEAT].set(ww)
    wmat = wmat.at[HEAD_R0:HEAD_R0 + FEAT, 0:6].set(whead6)
    return wmat.astype(jnp.bfloat16)


_COST = pl.CostEstimate(
    flops=2 * (M_CONV * K_PAD * COUT + B * M_CONV * COUT + B * COUT * FEAT
               + B * FEAT * 3 * C8 + B * C8 * FEAT + B * FEAT * OUT_PAD),
    transcendentals=B * C8 * C8,
    bytes_accessed=2 * (M_CONV * K_PAD + WMAT_ROWS * 128 + B * M_CONV)
                   + 4 * (B * FEAT + B * OUT_PAD),
)


@jax.jit
def atloc_forward(x, wmat, pool_mask, drop_mask):
    patches = _build_patches(x)
    out = pl.pallas_call(
        atloc_kernel,
        out_shape=jax.ShapeDtypeStruct((B, OUT_PAD), jnp.float32),
        in_specs=[pl.BlockSpec(memory_space=pltpu.MemorySpace.VMEM)] * 4,
        out_specs=pl.BlockSpec(memory_space=pltpu.MemorySpace.VMEM),
        cost_estimate=_COST,
    )(patches, wmat, pool_mask, drop_mask)
    return out[:, :6]


def reference_forward(x, wconv_k, wfe, watt, ww, whead6, mask):
    # Independent JAX implementation (lax.conv / mean / softmax / einsum) with
    # the same bf16 operand quantization + f32 accumulation as the kernel.
    bf, f32 = jnp.bfloat16, jnp.float32
    wt = jnp.transpose(wconv_k.reshape(KH, KW, CIN, COUT), (3, 2, 0, 1)).astype(bf)
    conv = jax.lax.conv_general_dilated(
        x.astype(bf), wt, window_strides=(1, 1), padding=((1, 1), (1, 1)),
        dimension_numbers=('NCHW', 'OIHW', 'NCHW'),
        preferred_element_type=f32)
    conv = jnp.maximum(conv, 0.0)
    pooled = conv.astype(bf).astype(f32).mean(axis=(2, 3))                 # (B, COUT)
    feat = jnp.maximum(
        jnp.dot(pooled.astype(bf), wfe.astype(bf), preferred_element_type=f32), 0.0)
    proj = jnp.dot(feat.astype(bf), watt.astype(bf), preferred_element_type=f32)
    gx, th, ph = proj[:, :C8], proj[:, C8:2 * C8], proj[:, 2 * C8:]
    f = ph[:, :, None] * th[:, None, :]                                    # (B, C8, C8)
    a = jax.nn.softmax(f, axis=-1)
    y = jnp.einsum('bij,bj->bi', a, gx)                                    # (B, C8)
    z = jnp.dot(y.astype(bf), ww.astype(bf), preferred_element_type=f32) + feat
    z = z * mask
    return jnp.dot(z.astype(bf), whead6.astype(bf), preferred_element_type=f32)


def kaiming(key, shape, fan_in):
    return jax.random.normal(key, shape, jnp.float32) * jnp.sqrt(2.0 / fan_in)


if __name__ == "__main__":
    key = jax.random.PRNGKey(0)
    keys = jax.random.split(key, 10)

    # Input in PyTorch NCHW layout.
    x = jax.random.normal(keys[0], (B, CIN, H, W), jnp.float32)

    # Deterministic synthetic parameters (kaiming-normal weights, zero biases),
    # stored pre-transposed so the kernel computes x @ W.
    wconv_k = kaiming(keys[1], (KH * KW, CIN, COUT), CIN * KH * KW)   # conv, per-tap (CIN, COUT)
    wfe = kaiming(keys[2], (COUT, FEAT), COUT)                        # backbone fc
    wg = kaiming(keys[3], (FEAT, C8), FEAT)                           # attention g
    wth = kaiming(keys[4], (FEAT, C8), FEAT)                          # attention theta
    wph = kaiming(keys[5], (FEAT, C8), FEAT)                          # attention phi
    watt = jnp.concatenate([wg, wth, wph], axis=1)                    # fused (FEAT, 3*C8)
    ww = kaiming(keys[6], (C8, FEAT), C8)                             # attention W
    wxyz = kaiming(keys[7], (FEAT, 3), FEAT)                          # fc_xyz
    wwpqr = kaiming(keys[8], (FEAT, 3), FEAT)                         # fc_wpqr
    whead6 = jnp.concatenate([wxyz, wwpqr], axis=1)                   # fused head (FEAT, 6)

    # Deterministic inverted-dropout mask (F.dropout defaults to training=True).
    keep = jax.random.bernoulli(keys[9], 1.0 - DROPRATE, (B, FEAT))
    drop_mask = keep.astype(jnp.float32) / (1.0 - DROPRATE)

    wmat = pack_params(wconv_k, wfe, watt, ww, whead6)
    pool_mask = build_pool_mask()

    out = atloc_forward(x, wmat, pool_mask, drop_mask)
    out = jax.block_until_ready(out)

    ref = reference_forward(x, wconv_k, wfe, watt, ww, whead6, drop_mask)
    assert out.shape == (B, 6), out.shape
    assert jnp.allclose(out, ref, rtol=1e-2, atol=5e-3), (out, ref)

    print("KERNEL_OK")
</pallas_src>

<mosaic_0001>
module attributes {stable_mosaic.version = 11 : i64} {
  func.func @atloc_kernel(%arg0: memref<512x48xbf16, #tpu.memory_space<vmem>>, %arg1: memref<160x128xbf16, #tpu.memory_space<vmem>>, %arg2: memref<2x512xbf16, #tpu.memory_space<vmem>>, %arg3: memref<2x32xf32, #tpu.memory_space<vmem>>, %arg4: memref<2x128xf32, #tpu.memory_space<vmem>>) attributes {dimension_semantics = [], scalar_prefetch = 0 : i64, scratch_operands = 0 : i64, tpu.core_type = #tpu.core_type<tc>} {
    %c0 = arith.constant 0 : index
    %c0_0 = arith.constant 0 : index
    %0 = vector.load %arg1[%c0, %c0_0] : memref<160x128xbf16, #tpu.memory_space<vmem>>, vector<48x32xbf16>
    %c0_1 = arith.constant 0 : index
    %c0_2 = arith.constant 0 : index
    %1 = vector.load %arg0[%c0_1, %c0_2] : memref<512x48xbf16, #tpu.memory_space<vmem>>, vector<512x48xbf16>
    %cst = arith.constant dense<0.000000e+00> : vector<512x32xf32>
    %2 = tpu.matmul %1, %0, %cst {dimension_numbers = #tpu.dot_dimension_numbers<[1], [0], [0], [1], [0, 0, 1, 1], [], []>} : vector<512x48xbf16>, vector<48x32xbf16>, vector<512x32xf32> -> vector<512x32xf32>
    %cst_3 = arith.constant 0.000000e+00 : f32
    %3 = vector.broadcast %cst_3 : f32 to vector<512x32xf32>
    %4 = arith.maximumf %2, %3 : vector<512x32xf32>
    %c0_4 = arith.constant 0 : index
    %c0_5 = arith.constant 0 : index
    %5 = vector.load %arg2[%c0_4, %c0_5] : memref<2x512xbf16, #tpu.memory_space<vmem>>, vector<2x512xbf16>
    %6 = arith.truncf %4 : vector<512x32xf32> to vector<512x32xbf16>
    %cst_6 = arith.constant dense<0.000000e+00> : vector<2x32xf32>
    %7 = tpu.matmul %5, %6, %cst_6 {dimension_numbers = #tpu.dot_dimension_numbers<[1], [0], [0], [1], [0, 0, 1, 1], [], []>} : vector<2x512xbf16>, vector<512x32xbf16>, vector<2x32xf32> -> vector<2x32xf32>
    %c48 = arith.constant 48 : index
    %c0_7 = arith.constant 0 : index
    %8 = vector.load %arg1[%c48, %c0_7] : memref<160x128xbf16, #tpu.memory_space<vmem>>, vector<32x32xbf16>
    %9 = arith.truncf %7 : vector<2x32xf32> to vector<2x32xbf16>
    %cst_8 = arith.constant dense<0.000000e+00> : vector<2x32xf32>
    %10 = tpu.matmul %9, %8, %cst_8 {dimension_numbers = #tpu.dot_dimension_numbers<[1], [0], [0], [1], [0, 0, 1, 1], [], []>} : vector<2x32xbf16>, vector<32x32xbf16>, vector<2x32xf32> -> vector<2x32xf32>
    %cst_9 = arith.constant 0.000000e+00 : f32
    %11 = vector.broadcast %cst_9 : f32 to vector<2x32xf32>
    %12 = arith.maximumf %10, %11 : vector<2x32xf32>
    %c80 = arith.constant 80 : index
    %c0_10 = arith.constant 0 : index
    %13 = vector.load %arg1[%c80, %c0_10] : memref<160x128xbf16, #tpu.memory_space<vmem>>, vector<32x12xbf16>
    %14 = arith.truncf %12 : vector<2x32xf32> to vector<2x32xbf16>
    %cst_11 = arith.constant dense<0.000000e+00> : vector<2x12xf32>
    %15 = tpu.matmul %14, %13, %cst_11 {dimension_numbers = #tpu.dot_dimension_numbers<[1], [0], [0], [1], [0, 0, 1, 1], [], []>} : vector<2x32xbf16>, vector<32x12xbf16>, vector<2x12xf32> -> vector<2x12xf32>
    %16 = vector.extract_strided_slice %15 {offsets = [0, 0], sizes = [2, 4], strides = [1, 1]} : vector<2x12xf32> to vector<2x4xf32>
    %17 = vector.extract_strided_slice %15 {offsets = [0, 4], sizes = [2, 4], strides = [1, 1]} : vector<2x12xf32> to vector<2x4xf32>
    %18 = vector.extract_strided_slice %15 {offsets = [0, 8], sizes = [2, 4], strides = [1, 1]} : vector<2x12xf32> to vector<2x4xf32>
    %19 = vector.extract_strided_slice %18 {offsets = [0, 0], sizes = [2, 1], strides = [1, 1]} : vector<2x4xf32> to vector<2x1xf32>
    %20 = vector.broadcast %19 : vector<2x1xf32> to vector<2x4xf32>
    %21 = arith.mulf %20, %17 : vector<2x4xf32>
    %cst_12 = arith.constant dense<0xFF800000> : vector<2xf32>
    %22 = vector.multi_reduction <maximumf>, %21, %cst_12 [1] : vector<2x4xf32> to vector<2xf32>
    %23 = vector.shape_cast %22 : vector<2xf32> to vector<2x1xf32>
    %24 = vector.broadcast %23 : vector<2x1xf32> to vector<2x4xf32>
    %25 = arith.subf %21, %24 : vector<2x4xf32>
    %26 = math.exp %25 : vector<2x4xf32>
    %27 = arith.mulf %26, %16 : vector<2x4xf32>
    %cst_13 = arith.constant dense<0.000000e+00> : vector<2xf32>
    %28 = vector.multi_reduction <add>, %27, %cst_13 [1] : vector<2x4xf32> to vector<2xf32>
    %29 = vector.shape_cast %28 : vector<2xf32> to vector<2x1xf32>
    %cst_14 = arith.constant dense<0.000000e+00> : vector<2xf32>
    %30 = vector.multi_reduction <add>, %26, %cst_14 [1] : vector<2x4xf32> to vector<2xf32>
    %31 = vector.shape_cast %30 : vector<2xf32> to vector<2x1xf32>
    %32 = arith.divf %29, %31 : vector<2x1xf32>
    %33 = vector.extract_strided_slice %18 {offsets = [0, 1], sizes = [2, 1], strides = [1, 1]} : vector<2x4xf32> to vector<2x1xf32>
    %34 = vector.broadcast %33 : vector<2x1xf32> to vector<2x4xf32>
    %35 = arith.mulf %34, %17 : vector<2x4xf32>
    %cst_15 = arith.constant dense<0xFF800000> : vector<2xf32>
    %36 = vector.multi_reduction <maximumf>, %35, %cst_15 [1] : vector<2x4xf32> to vector<2xf32>
    %37 = vector.shape_cast %36 : vector<2xf32> to vector<2x1xf32>
    %38 = vector.broadcast %37 : vector<2x1xf32> to vector<2x4xf32>
    %39 = arith.subf %35, %38 : vector<2x4xf32>
    %40 = math.exp %39 : vector<2x4xf32>
    %41 = arith.mulf %40, %16 : vector<2x4xf32>
    %cst_16 = arith.constant dense<0.000000e+00> : vector<2xf32>
    %42 = vector.multi_reduction <add>, %41, %cst_16 [1] : vector<2x4xf32> to vector<2xf32>
    %43 = vector.shape_cast %42 : vector<2xf32> to vector<2x1xf32>
    %cst_17 = arith.constant dense<0.000000e+00> : vector<2xf32>
    %44 = vector.multi_reduction <add>, %40, %cst_17 [1] : vector<2x4xf32> to vector<2xf32>
    %45 = vector.shape_cast %44 : vector<2xf32> to vector<2x1xf32>
    %46 = arith.divf %43, %45 : vector<2x1xf32>
    %47 = vector.extract_strided_slice %18 {offsets = [0, 2], sizes = [2, 1], strides = [1, 1]} : vector<2x4xf32> to vector<2x1xf32>
    %48 = vector.broadcast %47 : vector<2x1xf32> to vector<2x4xf32>
    %49 = arith.mulf %48, %17 : vector<2x4xf32>
    %cst_18 = arith.constant dense<0xFF800000> : vector<2xf32>
    %50 = vector.multi_reduction <maximumf>, %49, %cst_18 [1] : vector<2x4xf32> to vector<2xf32>
    %51 = vector.shape_cast %50 : vector<2xf32> to vector<2x1xf32>
    %52 = vector.broadcast %51 : vector<2x1xf32> to vector<2x4xf32>
    %53 = arith.subf %49, %52 : vector<2x4xf32>
    %54 = math.exp %53 : vector<2x4xf32>
    %55 = arith.mulf %54, %16 : vector<2x4xf32>
    %cst_19 = arith.constant dense<0.000000e+00> : vector<2xf32>
    %56 = vector.multi_reduction <add>, %55, %cst_19 [1] : vector<2x4xf32> to vector<2xf32>
    %57 = vector.shape_cast %56 : vector<2xf32> to vector<2x1xf32>
    %cst_20 = arith.constant dense<0.000000e+00> : vector<2xf32>
    %58 = vector.multi_reduction <add>, %54, %cst_20 [1] : vector<2x4xf32> to vector<2xf32>
    %59 = vector.shape_cast %58 : vector<2xf32> to vector<2x1xf32>
    %60 = arith.divf %57, %59 : vector<2x1xf32>
    %61 = vector.extract_strided_slice %18 {offsets = [0, 3], sizes = [2, 1], strides = [1, 1]} : vector<2x4xf32> to vector<2x1xf32>
    %62 = vector.broadcast %61 : vector<2x1xf32> to vector<2x4xf32>
    %63 = arith.mulf %62, %17 : vector<2x4xf32>
    %cst_21 = arith.constant dense<0xFF800000> : vector<2xf32>
    %64 = vector.multi_reduction <maximumf>, %63, %cst_21 [1] : vector<2x4xf32> to vector<2xf32>
    %65 = vector.shape_cast %64 : vector<2xf32> to vector<2x1xf32>
    %66 = vector.broadcast %65 : vector<2x1xf32> to vector<2x4xf32>
    %67 = arith.subf %63, %66 : vector<2x4xf32>
    %68 = math.exp %67 : vector<2x4xf32>
    %69 = arith.mulf %68, %16 : vector<2x4xf32>
    %cst_22 = arith.constant dense<0.000000e+00> : vector<2xf32>
    %70 = vector.multi_reduction <add>, %69, %cst_22 [1] : vector<2x4xf32> to vector<2xf32>
    %71 = vector.shape_cast %70 : vector<2xf32> to vector<2x1xf32>
    %cst_23 = arith.constant dense<0.000000e+00> : vector<2xf32>
    %72 = vector.multi_reduction <add>, %68, %cst_23 [1] : vector<2x4xf32> to vector<2xf32>
    %73 = vector.shape_cast %72 : vector<2xf32> to vector<2x1xf32>
    %74 = arith.divf %71, %73 : vector<2x1xf32>
    %75 = tpu.concatenate %32, %46, %60, %74 in 1 : vector<2x1xf32>, vector<2x1xf32>, vector<2x1xf32>, vector<2x1xf32> -> vector<2x4xf32>
    %c112 = arith.constant 112 : index
    %c0_24 = arith.constant 0 : index
    %76 = vector.load %arg1[%c112, %c0_24] : memref<160x128xbf16, #tpu.memory_space<vmem>>, vector<4x32xbf16>
    %77 = arith.truncf %75 : vector<2x4xf32> to vector<2x4xbf16>
    %cst_25 = arith.constant dense<0.000000e+00> : vector<2x32xf32>
    %78 = tpu.matmul %77, %76, %cst_25 {dimension_numbers = #tpu.dot_dimension_numbers<[1], [0], [0], [1], [0, 0, 1, 1], [], []>} : vector<2x4xbf16>, vector<4x32xbf16>, vector<2x32xf32> -> vector<2x32xf32>
    %79 = arith.addf %78, %12 : vector<2x32xf32>
    %c0_26 = arith.constant 0 : index
    %c0_27 = arith.constant 0 : index
    %80 = vector.load %arg3[%c0_26, %c0_27] : memref<2x32xf32, #tpu.memory_space<vmem>>, vector<2x32xf32>
    %81 = arith.mulf %79, %80 : vector<2x32xf32>
    %c128 = arith.constant 128 : index
    %c0_28 = arith.constant 0 : index
    %82 = vector.load %arg1[%c128, %c0_28] : memref<160x128xbf16, #tpu.memory_space<vmem>>, vector<32x128xbf16>
    %83 = arith.truncf %81 : vector<2x32xf32> to vector<2x32xbf16>
    %cst_29 = arith.constant dense<0.000000e+00> : vector<2x128xf32>
    %84 = tpu.matmul %83, %82, %cst_29 {dimension_numbers = #tpu.dot_dimension_numbers<[1], [0], [0], [1], [0, 0, 1, 1], [], []>} : vector<2x32xbf16>, vector<32x128xbf16>, vector<2x128xf32> -> vector<2x128xf32>
    %c0_30 = arith.constant 0 : index
    %c0_31 = arith.constant 0 : index
    %85 = vector.load %arg4[%c0_30, %c0_31] : memref<2x128xf32, #tpu.memory_space<vmem>>, vector<2x128xf32>
    tpu.vector_store %arg4[%c0_30, %c0_31], %84 {strides = array<i32>} : memref<2x128xf32, #tpu.memory_space<vmem>>, vector<2x128xf32>,
    return
  }
}

</mosaic_0001>

<llo_original>
// kernel: atloc_forward.1
$region0: #{atloc_forward.1}
  #allocation0 [shape = 'u32[]', space=smem, size = 0x4, offset = 0x4, fixed_abs, tag = 'smem constant byte address 0x4 - core index']
  #allocation1 [shape = 'u32[144,128]{1,0:T(1,128)}', space=vmem, size = 0x12000, scoped, tag = 'internal scratch']
  %s0 = inlined_call_operand.vmem [shape: bf16[512,48], index: 0, kind: input, shape index: {}]
  %s1 = inlined_call_operand.vmem [shape: bf16[160,128], index: 1, kind: input, shape index: {}]
  %s2 = inlined_call_operand.vmem [shape: bf16[2,512], index: 2, kind: input, shape index: {}]
  %s3 = inlined_call_operand.vmem [shape: f32[2,32], index: 3, kind: input, shape index: {}]
  %s4 = inlined_call_operand.hbm [shape: f32[2,128], index: 4, kind: output, shape index: {}]
  %s5 = sld [smem:[#allocation0]]
  $region26: #{atloc_forward.1} parent=0
    _
  %s7 = ssub.s32 1, %s5
  %s8 = scalar_select 0, %s7, %s5
  $region1: #{atloc_forward.1} parent=0
    #allocation2 [shape = 'u8[1024]{0}', space=vmem, size = 0x400, scoped, tag = 'output window, operand 0, single buffered']
    #allocation3 [shape = 's32[1]{0}', space=sflag, size = 0x4, scoped, tag = 'scoped memory for atloc_forward.1']
    %9 = vsyncpa [#allocation3], 0
    // Predicated region
    $region2: #{atloc_forward.1} parent=1 // pred_check
      _
    $region3: #{atloc_forward.1} parent=1 // pred_check_branch
      %11 = sbr.rel (0) target = $region5
    $region4: #{atloc_forward.1} parent=1 // pred_region
      _
    $region5: #{atloc_forward.1} parent=1 // pred_fallthru
      _
    // Predicated region
    $region6: #{atloc_forward.1} parent=1 // pred_check
      _
    $region7: #{atloc_forward.1} parent=1 // pred_check_branch
      %13 = sbr.rel (0) target = $region9
    $region8: #{atloc_forward.1} parent=1 // pred_region
      _
    $region9: #{atloc_forward.1} parent=1 // pred_fallthru
      _
    // Predicated region
    $region10: #{atloc_forward.1} parent=1 // pred_check
      _
    $region11: #{atloc_forward.1} parent=1 // pred_check_branch
      %15 = sbr.rel (0) target = $region13
    $region12: #{atloc_forward.1} parent=1 // pred_region
      _
    $region13: #{atloc_forward.1} parent=1 // pred_fallthru
      _
    // Predicated region
    $region14: #{atloc_forward.1} parent=1 // pred_check
      _
    $region15: #{atloc_forward.1} parent=1 // pred_check_branch
      %17 = sbr.rel (0) target = $region17
    $region16: #{atloc_forward.1} parent=1 // pred_region
      _
    $region17: #{atloc_forward.1} parent=1 // pred_fallthru
      _
    %v19 = vld [vmem:[%s1] sm:$0xf]
    %v20 = vld [vmem:[%s1 + $0x4] sm:$0xf]
    %v21 = vld [vmem:[%s1 + $0x8] sm:$0xf]
    %v22 = vld [vmem:[%s1 + $0xc] sm:$0xf]
    %v23 = vld [vmem:[%s1 + $0x10] sm:$0xf]
    %v24 = vld [vmem:[%s1 + $0x14] sm:$0xf]
    %v25 = vld [vmem:[%s0] sm:$0xf]
    %v26 = vld [vmem:[%s0 + $0x4] sm:$0xf]
    %v27 = vld [vmem:[%s0 + $0x8] sm:$0xf]
    %v28 = vld [vmem:[%s0 + $0xc] sm:$0xf]
    %v29 = vld [vmem:[%s0 + $0x10] sm:$0xf]
    %v30 = vld [vmem:[%s0 + $0x14] sm:$0xf]
    %v31 = vld [vmem:[%s0 + $0x18] sm:$0xf]
    %v32 = vld [vmem:[%s0 + $0x1c] sm:$0xf]
    %v33 = vld [vmem:[%s0 + $0x20] sm:$0xf]
    %v34 = vld [vmem:[%s0 + $0x24] sm:$0xf]
    %v35 = vld [vmem:[%s0 + $0x28] sm:$0xf]
    %v36 = vld [vmem:[%s0 + $0x2c] sm:$0xf]
    %v37 = vld [vmem:[%s0 + $0x30] sm:$0xf]
    %v38 = vld [vmem:[%s0 + $0x34] sm:$0xf]
    %v39 = vld [vmem:[%s0 + $0x38] sm:$0xf]
    %v40 = vld [vmem:[%s0 + $0x3c] sm:$0xf]
    %v41 = vld [vmem:[%s0 + $0x40] sm:$0xf]
    %v42 = vld [vmem:[%s0 + $0x44] sm:$0xf]
    %v43 = vld [vmem:[%s0 + $0x48] sm:$0xf]
    %v44 = vld [vmem:[%s0 + $0x4c] sm:$0xf]
    %v45 = vld [vmem:[%s0 + $0x50] sm:$0xf]
    %v46 = vld [vmem:[%s0 + $0x54] sm:$0xf]
    %v47 = vld [vmem:[%s0 + $0x58] sm:$0xf]
    %v48 = vld [vmem:[%s0 + $0x5c] sm:$0xf]
    %v49 = vld [vmem:[%s0 + $0x60] sm:$0xf]
    %v50 = vld [vmem:[%s0 + $0x64] sm:$0xf]
    %v51 = vld [vmem:[%s0 + $0x68] sm:$0xf]
    %v52 = vld [vmem:[%s0 + $0x6c] sm:$0xf]
    %v53 = vld [vmem:[%s0 + $0x70] sm:$0xf]
    %v54 = vld [vmem:[%s0 + $0x74] sm:$0xf]
    %v55 = vld [vmem:[%s0 + $0x78] sm:$0xf]
    %v56 = vld [vmem:[%s0 + $0x7c] sm:$0xf]
    %v57 = vld [vmem:[%s0 + $0x80] sm:$0xf]
    %v58 = vld [vmem:[%s0 + $0x84] sm:$0xf]
    %v59 = vld [vmem:[%s0 + $0x88] sm:$0xf]
    %v60 = vld [vmem:[%s0 + $0x8c] sm:$0xf]
    %v61 = vld [vmem:[%s0 + $0x90] sm:$0xf]
    %v62 = vld [vmem:[%s0 + $0x94] sm:$0xf]
    %v63 = vld [vmem:[%s0 + $0x98] sm:$0xf]
    %v64 = vld [vmem:[%s0 + $0x9c] sm:$0xf]
    %v65 = vld [vmem:[%s0 + $0xa0] sm:$0xf]
    %v66 = vld [vmem:[%s0 + $0xa4] sm:$0xf]
    %v67 = vld [vmem:[%s0 + $0xa8] sm:$0xf]
    %v68 = vld [vmem:[%s0 + $0xac] sm:$0xf]
    %v69 = vld [vmem:[%s0 + $0xb0] sm:$0xf]
    %v70 = vld [vmem:[%s0 + $0xb4] sm:$0xf]
    %v71 = vld [vmem:[%s0 + $0xb8] sm:$0xf]
    %v72 = vld [vmem:[%s0 + $0xbc] sm:$0xf]
    %v73 = vld [vmem:[%s0 + $0xc0] sm:$0xf]
    %v74 = vld [vmem:[%s0 + $0xc4] sm:$0xf]
    %v75 = vld [vmem:[%s0 + $0xc8] sm:$0xf]
    %v76 = vld [vmem:[%s0 + $0xcc] sm:$0xf]
    %v77 = vld [vmem:[%s0 + $0xd0] sm:$0xf]
    %v78 = vld [vmem:[%s0 + $0xd4] sm:$0xf]
    %v79 = vld [vmem:[%s0 + $0xd8] sm:$0xf]
    %v80 = vld [vmem:[%s0 + $0xdc] sm:$0xf]
    %v81 = vld [vmem:[%s0 + $0xe0] sm:$0xf]
    %v82 = vld [vmem:[%s0 + $0xe4] sm:$0xf]
    %v83 = vld [vmem:[%s0 + $0xe8] sm:$0xf]
    %v84 = vld [vmem:[%s0 + $0xec] sm:$0xf]
    %v85 = vld [vmem:[%s0 + $0xf0] sm:$0xf]
    %v86 = vld [vmem:[%s0 + $0xf4] sm:$0xf]
    %v87 = vld [vmem:[%s0 + $0xf8] sm:$0xf]
    %v88 = vld [vmem:[%s0 + $0xfc] sm:$0xf]
    %v153 = vunpack.c.l.b16 %v25
    %v154 = vunpack.c.l.b16 %v26
    %v155 = vunpack.c.l.b16 %v27
    %v156 = vunpack.c.l.b16 %v28
    %v157 = vunpack.c.l.b16 %v29
    %v158 = vunpack.c.l.b16 %v30
    %v159 = vunpack.c.l.b16 %v31
    %v160 = vunpack.c.l.b16 %v32
    %v161 = vunpack.c.l.b16 %v33
    %v162 = vunpack.c.l.b16 %v34
    %v163 = vunpack.c.l.b16 %v35
    %v164 = vunpack.c.l.b16 %v36
    %v165 = vunpack.c.l.b16 %v37
    %v166 = vunpack.c.l.b16 %v38
    %v167 = vunpack.c.l.b16 %v39
    %v168 = vunpack.c.l.b16 %v40
    %v169 = vunpack.c.l.b16 %v41
    %v170 = vunpack.c.l.b16 %v42
    %v171 = vunpack.c.l.b16 %v43
    %v172 = vunpack.c.l.b16 %v44
    %v173 = vunpack.c.l.b16 %v45
    %v174 = vunpack.c.l.b16 %v46
    %v175 = vunpack.c.l.b16 %v47
    %v176 = vunpack.c.l.b16 %v48
    %v177 = vunpack.c.l.b16 %v49
    %v178 = vunpack.c.l.b16 %v50
    %v179 = vunpack.c.l.b16 %v51
    %v180 = vunpack.c.l.b16 %v52
    %v181 = vunpack.c.l.b16 %v53
    %v182 = vunpack.c.l.b16 %v54
    %v183 = vunpack.c.l.b16 %v55
    %v184 = vunpack.c.l.b16 %v56
    %v185 = vunpack.c.l.b16 %v57
    %v186 = vunpack.c.l.b16 %v58
    %v187 = vunpack.c.l.b16 %v59
    %v188 = vunpack.c.l.b16 %v60
    %v189 = vunpack.c.l.b16 %v61
    %v190 = vunpack.c.l.b16 %v62
    %v191 = vunpack.c.l.b16 %v63
    %v192 = vunpack.c.l.b16 %v64
    %v193 = vunpack.c.l.b16 %v65
    %v194 = vunpack.c.l.b16 %v66
    %v195 = vunpack.c.l.b16 %v67
    %v196 = vunpack.c.l.b16 %v68
    %v197 = vunpack.c.l.b16 %v69
    %v198 = vunpack.c.l.b16 %v70
    %v199 = vunpack.c.l.b16 %v71
    %v200 = vunpack.c.l.b16 %v72
    %v201 = vunpack.c.l.b16 %v73
    %v202 = vunpack.c.l.b16 %v74
    %v203 = vunpack.c.l.b16 %v75
    %v204 = vunpack.c.l.b16 %v76
    %v205 = vunpack.c.l.b16 %v77
    %v206 = vunpack.c.l.b16 %v78
    %v207 = vunpack.c.l.b16 %v79
    %v208 = vunpack.c.l.b16 %v80
    %v209 = vunpack.c.l.b16 %v81
    %v210 = vunpack.c.l.b16 %v82
    %v211 = vunpack.c.l.b16 %v83
    %v212 = vunpack.c.l.b16 %v84
    %v213 = vunpack.c.l.b16 %v85
    %v214 = vunpack.c.l.b16 %v86
    %v215 = vunpack.c.l.b16 %v87
    %v216 = vunpack.c.l.b16 %v88
    %v217 = vpack.c.b16 %v154, %v153
    %v218 = vpack.c.b16 %v156, %v155
    %v219 = vpack.c.b16 %v158, %v157
    %v220 = vpack.c.b16 %v160, %v159
    %v221 = vpack.c.b16 %v162, %v161
    %v222 = vpack.c.b16 %v164, %v163
    %v223 = vpack.c.b16 %v166, %v165
    %v224 = vpack.c.b16 %v168, %v167
    %v225 = vpack.c.b16 %v170, %v169
    %v226 = vpack.c.b16 %v172, %v171
    %v227 = vpack.c.b16 %v174, %v173
    %v228 = vpack.c.b16 %v176, %v175
    %v229 = vpack.c.b16 %v178, %v177
    %v230 = vpack.c.b16 %v180, %v179
    %v231 = vpack.c.b16 %v182, %v181
    %v232 = vpack.c.b16 %v184, %v183
    %v233 = vpack.c.b16 %v186, %v185
    %v234 = vpack.c.b16 %v188, %v187
    %v235 = vpack.c.b16 %v190, %v189
    %v236 = vpack.c.b16 %v192, %v191
    %v237 = vpack.c.b16 %v194, %v193
    %v238 = vpack.c.b16 %v196, %v195
    %v239 = vpack.c.b16 %v198, %v197
    %v240 = vpack.c.b16 %v200, %v199
    %v241 = vpack.c.b16 %v202, %v201
    %v242 = vpack.c.b16 %v204, %v203
    %v243 = vpack.c.b16 %v206, %v205
    %v244 = vpack.c.b16 %v208, %v207
    %v245 = vpack.c.b16 %v210, %v209
    %v246 = vpack.c.b16 %v212, %v211
    %v247 = vpack.c.b16 %v214, %v213
    %v248 = vpack.c.b16 %v216, %v215
    %v255 = vunpack.c.l.b16 %v19
    %v256 = vunpack.c.l.b16 %v20
    %v257 = vunpack.c.l.b16 %v21
    %v258 = vunpack.c.l.b16 %v22
    %v259 = vunpack.c.l.b16 %v23
    %v260 = vunpack.c.l.b16 %v24
    %v261 = vpack.c.b16 %v256, %v255
    %v262 = vpack.c.b16 %v258, %v257
    %v263 = vpack.c.b16 %v260, %v259
    %vm267 = vcmask 392192
    %v269 = vsel %vm267, %v217, 0
    %v272 = vsel %vm267, %v218, 0
    %v275 = vsel %vm267, %v219, 0
    %v278 = vsel %vm267, %v220, 0
    %v281 = vsel %vm267, %v221, 0
    %v284 = vsel %vm267, %v222, 0
    %v287 = vsel %vm267, %v223, 0
    %v290 = vsel %vm267, %v224, 0
    %v293 = vsel %vm267, %v225, 0
    %v296 = vsel %vm267, %v226, 0
    %v299 = vsel %vm267, %v227, 0
    %v302 = vsel %vm267, %v228, 0
    %v305 = vsel %vm267, %v229, 0
    %v308 = vsel %vm267, %v230, 0
    %v311 = vsel %vm267, %v231, 0
    %v314 = vsel %vm267, %v232, 0
    %v317 = vsel %vm267, %v233, 0
    %v320 = vsel %vm267, %v234, 0
    %v323 = vsel %vm267, %v235, 0
    %v326 = vsel %vm267, %v236, 0
    %v329 = vsel %vm267, %v237, 0
    %v332 = vsel %vm267, %v238, 0
    %v335 = vsel %vm267, %v239, 0
    %v338 = vsel %vm267, %v240, 0
    %v341 = vsel %vm267, %v241, 0
    %v344 = vsel %vm267, %v242, 0
    %v347 = vsel %vm267, %v243, 0
    %v350 = vsel %vm267, %v244, 0
    %v353 = vsel %vm267, %v245, 0
    %v356 = vsel %vm267, %v246, 0
    %v359 = vsel %vm267, %v247, 0
    %v362 = vsel %vm267, %v248, 0
    %364 = vmatprep.subr.bf16.mxu0 0
    %365 = vmatpush1.bf16.msra.mxu0 0
    %366 = vmatprep.subr.bf16.mxu0 0
    %367 = vmatpush1.bf16.msra.mxu0 0
    %368 = vmatprep.subr.bf16.mxu0 0
    %369 = vmatpush1.bf16.msra.mxu0 0
    %370 = vmatprep.subr.bf16.mxu0 0
    %371 = vmatpush1.bf16.msra.mxu0 0
    %372 = vmatprep.subr.bf16.mxu0 0
    %373 = vmatpush1.bf16.msra.mxu0 0
    %374 = vmatprep.subr.bf16.mxu0 0
    %375 = vmatpush1.bf16.msra.mxu0 %v263
    %376 = vmatprep.subr.bf16.mxu0 0
    %377 = vmatpush1.bf16.msra.mxu0 %v262
    %378 = vmatprep.subr.bf16.mxu0 0
    %379 = vmatpush1.bf16.msra.mxu0 %v261
    %380 = vmatprep.subr.bf16.mxu0 0
    %381 = vmatpush2.bf16.msra.mxu0 0
    %382 = vmatprep.subr.bf16.mxu0 0
    %383 = vmatpush2.bf16.msra.mxu0 0
    %384 = vmatprep.subr.bf16.mxu0 0
    %385 = vmatpush2.bf16.msra.mxu0 0
    %386 = vmatprep.subr.bf16.mxu0 0
    %387 = vmatpush2.bf16.msra.mxu0 0
    %388 = vmatprep.subr.bf16.mxu0 0
    %389 = vmatpush2.bf16.msra.mxu0 0
    %390 = vmatprep.subr.bf16.mxu0 0
    %391 = vmatpush2.bf16.msra.mxu0 0
    %392 = vmatprep.subr.bf16.mxu0 0
    %393 = vmatpush2.bf16.msra.mxu0 0
    %394 = vmatprep.subr.bf16.mxu0 0
    %395 = vmatpush2.bf16.msra.mxu0 0
    %396 = vmatprep.mubr.bf16.mxu0 0
    %397 = vmatmul.mubr.bf16.gmra.mxu0 %v269
    %v398 = vpop.f32.mrf.mxu0
    %v399 = vadd.f32 0.0, %v398
    %v400 = vpop.f32.mrf.mxu0
    %v401 = vpop.f32.mrf.mxu0
    %v402 = vadd.f32 0.0, %v401
    %v403 = vpop.f32.mrf.mxu0
    %404 = vmatprep.mubr.bf16.mxu0 0
    %405 = vmatmul.mubr.bf16.gmra.mxu0 %v272
    %v406 = vpop.f32.mrf.mxu0
    %v407 = vadd.f32 0.0, %v406
    %v408 = vpop.f32.mrf.mxu0
    %v409 = vpop.f32.mrf.mxu0
    %v410 = vadd.f32 0.0, %v409
    %v411 = vpop.f32.mrf.mxu0
    %412 = vmatprep.mubr.bf16.mxu0 0
    %413 = vmatmul.mubr.bf16.gmra.mxu0 %v275
    %v414 = vpop.f32.mrf.mxu0
    %v415 = vadd.f32 0.0, %v414
    %v416 = vpop.f32.mrf.mxu0
    %v417 = vpop.f32.mrf.mxu0
    %v418 = vadd.f32 0.0, %v417
    %v419 = vpop.f32.mrf.mxu0
    %420 = vmatprep.mubr.bf16.mxu0 0
    %421 = vmatmul.mubr.bf16.gmra.mxu0 %v278
    %v422 = vpop.f32.mrf.mxu0
    %v423 = vadd.f32 0.0, %v422
    %v424 = vpop.f32.mrf.mxu0
    %v425 = vpop.f32.mrf.mxu0
    %v426 = vadd.f32 0.0, %v425
    %v427 = vpop.f32.mrf.mxu0
    %428 = vmatprep.mubr.bf16.mxu0 0
    %429 = vmatmul.mubr.bf16.gmra.mxu0 %v281
    %v430 = vpop.f32.mrf.mxu0
    %v431 = vadd.f32 0.0, %v430
    %v432 = vpop.f32.mrf.mxu0
    %v433 = vpop.f32.mrf.mxu0
    %v434 = vadd.f32 0.0, %v433
    %v435 = vpop.f32.mrf.mxu0
    %436 = vmatprep.mubr.bf16.mxu0 0
    %437 = vmatmul.mubr.bf16.gmra.mxu0 %v284
    %v438 = vpop.f32.mrf.mxu0
    %v439 = vadd.f32 0.0, %v438
    %v440 = vpop.f32.mrf.mxu0
    %v441 = vpop.f32.mrf.mxu0
    %v442 = vadd.f32 0.0, %v441
    %v443 = vpop.f32.mrf.mxu0
    %444 = vmatprep.mubr.bf16.mxu0 0
    %445 = vmatmul.mubr.bf16.gmra.mxu0 %v287
    %v446 = vpop.f32.mrf.mxu0
    %v447 = vadd.f32 0.0, %v446
    %v448 = vpop.f32.mrf.mxu0
    %v449 = vpop.f32.mrf.mxu0
    %v450 = vadd.f32 0.0, %v449
    %v451 = vpop.f32.mrf.mxu0
    %452 = vmatprep.mubr.bf16.mxu0 0
    %453 = vmatmul.mubr.bf16.gmra.mxu0 %v290
    %v454 = vpop.f32.mrf.mxu0
    %v455 = vadd.f32 0.0, %v454
    %v456 = vpop.f32.mrf.mxu0
    %v457 = vpop.f32.mrf.mxu0
    %v458 = vadd.f32 0.0, %v457
    %v459 = vpop.f32.mrf.mxu0
    %460 = vmatprep.mubr.bf16.mxu0 0
    %461 = vmatmul.mubr.bf16.gmra.mxu0 %v293
    %v462 = vpop.f32.mrf.mxu0
    %v463 = vadd.f32 0.0, %v462
    %v464 = vpop.f32.mrf.mxu0
    %v465 = vpop.f32.mrf.mxu0
    %v466 = vadd.f32 0.0, %v465
    %v467 = vpop.f32.mrf.mxu0
    %468 = vmatprep.mubr.bf16.mxu0 0
    %469 = vmatmul.mubr.bf16.gmra.mxu0 %v296
    %v470 = vpop.f32.mrf.mxu0
    %v471 = vadd.f32 0.0, %v470
    %v472 = vpop.f32.mrf.mxu0
    %v473 = vpop.f32.mrf.mxu0
    %v474 = vadd.f32 0.0, %v473
    %v475 = vpop.f32.mrf.mxu0
    %476 = vmatprep.mubr.bf16.mxu0 0
    %477 = vmatmul.mubr.bf16.gmra.mxu0 %v299
    %v478 = vpop.f32.mrf.mxu0
    %v479 = vadd.f32 0.0, %v478
    %v480 = vpop.f32.mrf.mxu0
    %v481 = vpop.f32.mrf.mxu0
    %v482 = vadd.f32 0.0, %v481
    %v483 = vpop.f32.mrf.mxu0
    %484 = vmatprep.mubr.bf16.mxu0 0
    %485 = vmatmul.mubr.bf16.gmra.mxu0 %v302
    %v486 = vpop.f32.mrf.mxu0
    %v487 = vadd.f32 0.0, %v486
    %v488 = vpop.f32.mrf.mxu0
    %v489 = vpop.f32.mrf.mxu0
    %v490 = vadd.f32 0.0, %v489
    %v491 = vpop.f32.mrf.mxu0
    %492 = vmatprep.mubr.bf16.mxu0 0
    %493 = vmatmul.mubr.bf16.gmra.mxu0 %v305
    %v494 = vpop.f32.mrf.mxu0
    %v495 = vadd.f32 0.0, %v494
    %v496 = vpop.f32.mrf.mxu0
    %v497 = vpop.f32.mrf.mxu0
    %v498 = vadd.f32 0.0, %v497
    %v499 = vpop.f32.mrf.mxu0
    %500 = vmatprep.mubr.bf16.mxu0 0
    %501 = vmatmul.mubr.bf16.gmra.mxu0 %v308
    %v502 = vpop.f32.mrf.mxu0
    %v503 = vadd.f32 0.0, %v502
    %v504 = vpop.f32.mrf.mxu0
    %v505 = vpop.f32.mrf.mxu0
    %v506 = vadd.f32 0.0, %v505
    %v507 = vpop.f32.mrf.mxu0
    %508 = vmatprep.mubr.bf16.mxu0 0
    %509 = vmatmul.mubr.bf16.gmra.mxu0 %v311
    %v510 = vpop.f32.mrf.mxu0
    %v511 = vadd.f32 0.0, %v510
    %v512 = vpop.f32.mrf.mxu0
    %v513 = vpop.f32.mrf.mxu0
    %v514 = vadd.f32 0.0, %v513
    %v515 = vpop.f32.mrf.mxu0
    %516 = vmatprep.mubr.bf16.mxu0 0
    %517 = vmatmul.mubr.bf16.gmra.mxu0 %v314
    %v518 = vpop.f32.mrf.mxu0
    %v519 = vadd.f32 0.0, %v518
    %v520 = vpop.f32.mrf.mxu0
    %v521 = vpop.f32.mrf.mxu0
    %v522 = vadd.f32 0.0, %v521
    %v523 = vpop.f32.mrf.mxu0
    %524 = vmatprep.mubr.bf16.mxu0 0
    %525 = vmatmul.mubr.bf16.gmra.mxu0 %v317
    %v526 = vpop.f32.mrf.mxu0
    %v527 = vadd.f32 0.0, %v526
    %v528 = vpop.f32.mrf.mxu0
    %v529 = vpop.f32.mrf.mxu0
    %v530 = vadd.f32 0.0, %v529
    %v531 = vpop.f32.mrf.mxu0
    %532 = vmatprep.mubr.bf16.mxu0 0
    %533 = vmatmul.mubr.bf16.gmra.mxu0 %v320
    %v534 = vpop.f32.mrf.mxu0
    %v535 = vadd.f32 0.0, %v534
    %v536 = vpop.f32.mrf.mxu0
    %v537 = vpop.f32.mrf.mxu0
    %v538 = vadd.f32 0.0, %v537
    %v539 = vpop.f32.mrf.mxu0
    %540 = vmatprep.mubr.bf16.mxu0 0
    %541 = vmatmul.mubr.bf16.gmra.mxu0 %v323
    %v542 = vpop.f32.mrf.mxu0
    %v543 = vadd.f32 0.0, %v542
    %v544 = vpop.f32.mrf.mxu0
    %v545 = vpop.f32.mrf.mxu0
    %v546 = vadd.f32 0.0, %v545
    %v547 = vpop.f32.mrf.mxu0
    %548 = vmatprep.mubr.bf16.mxu0 0
    %549 = vmatmul.mubr.bf16.gmra.mxu0 %v326
    %v550 = vpop.f32.mrf.mxu0
    %v551 = vadd.f32 0.0, %v550
    %v552 = vpop.f32.mrf.mxu0
    %v553 = vpop.f32.mrf.mxu0
    %v554 = vadd.f32 0.0, %v553
    %v555 = vpop.f32.mrf.mxu0
    %556 = vmatprep.mubr.bf16.mxu0 0
    %557 = vmatmul.mubr.bf16.gmra.mxu0 %v329
    %v558 = vpop.f32.mrf.mxu0
    %v559 = vadd.f32 0.0, %v558
    %v560 = vpop.f32.mrf.mxu0
    %v561 = vpop.f32.mrf.mxu0
    %v562 = vadd.f32 0.0, %v561
    %v563 = vpop.f32.mrf.mxu0
    %564 = vmatprep.mubr.bf16.mxu0 0
    %565 = vmatmul.mubr.bf16.gmra.mxu0 %v332
    %v566 = vpop.f32.mrf.mxu0
    %v567 = vadd.f32 0.0, %v566
    %v568 = vpop.f32.mrf.mxu0
    %v569 = vpop.f32.mrf.mxu0
    %v570 = vadd.f32 0.0, %v569
    %v571 = vpop.f32.mrf.mxu0
    %572 = vmatprep.mubr.bf16.mxu0 0
    %573 = vmatmul.mubr.bf16.gmra.mxu0 %v335
    %v574 = vpop.f32.mrf.mxu0
    %v575 = vadd.f32 0.0, %v574
    %v576 = vpop.f32.mrf.mxu0
    %v577 = vpop.f32.mrf.mxu0
    %v578 = vadd.f32 0.0, %v577
    %v579 = vpop.f32.mrf.mxu0
    %580 = vmatprep.mubr.bf16.mxu0 0
    %581 = vmatmul.mubr.bf16.gmra.mxu0 %v338
    %v582 = vpop.f32.mrf.mxu0
    %v583 = vadd.f32 0.0, %v582
    %v584 = vpop.f32.mrf.mxu0
    %v585 = vpop.f32.mrf.mxu0
    %v586 = vadd.f32 0.0, %v585
    %v587 = vpop.f32.mrf.mxu0
    %588 = vmatprep.mubr.bf16.mxu0 0
    %589 = vmatmul.mubr.bf16.gmra.mxu0 %v341
    %v590 = vpop.f32.mrf.mxu0
    %v591 = vadd.f32 0.0, %v590
    %v592 = vpop.f32.mrf.mxu0
    %v593 = vpop.f32.mrf.mxu0
    %v594 = vadd.f32 0.0, %v593
    %v595 = vpop.f32.mrf.mxu0
    %596 = vmatprep.mubr.bf16.mxu0 0
    %597 = vmatmul.mubr.bf16.gmra.mxu0 %v344
    %v598 = vpop.f32.mrf.mxu0
    %v599 = vadd.f32 0.0, %v598
    %v600 = vpop.f32.mrf.mxu0
    %v601 = vpop.f32.mrf.mxu0
    %v602 = vadd.f32 0.0, %v601
    %v603 = vpop.f32.mrf.mxu0
    %604 = vmatprep.mubr.bf16.mxu0 0
    %605 = vmatmul.mubr.bf16.gmra.mxu0 %v347
    %v606 = vpop.f32.mrf.mxu0
    %v607 = vadd.f32 0.0, %v606
    %v608 = vpop.f32.mrf.mxu0
    %v609 = vpop.f32.mrf.mxu0
    %v610 = vadd.f32 0.0, %v609
    %v611 = vpop.f32.mrf.mxu0
    %612 = vmatprep.mubr.bf16.mxu0 0
    %613 = vmatmul.mubr.bf16.gmra.mxu0 %v350
    %v614 = vpop.f32.mrf.mxu0
    %v615 = vadd.f32 0.0, %v614
    %v616 = vpop.f32.mrf.mxu0
    %v617 = vpop.f32.mrf.mxu0
    %v618 = vadd.f32 0.0, %v617
    %v619 = vpop.f32.mrf.mxu0
    %620 = vmatprep.mubr.bf16.mxu0 0
    %621 = vmatmul.mubr.bf16.gmra.mxu0 %v353
    %v622 = vpop.f32.mrf.mxu0
    %v623 = vadd.f32 0.0, %v622
    %v624 = vpop.f32.mrf.mxu0
    %v625 = vpop.f32.mrf.mxu0
    %v626 = vadd.f32 0.0, %v625
    %v627 = vpop.f32.mrf.mxu0
    %628 = vmatprep.mubr.bf16.mxu0 0
    %629 = vmatmul.mubr.bf16.gmra.mxu0 %v356
    %v630 = vpop.f32.mrf.mxu0
    %v631 = vadd.f32 0.0, %v630
    %v632 = vpop.f32.mrf.mxu0
    %v633 = vpop.f32.mrf.mxu0
    %v634 = vadd.f32 0.0, %v633
    %v635 = vpop.f32.mrf.mxu0
    %636 = vmatprep.mubr.bf16.mxu0 0
    %637 = vmatmul.mubr.bf16.gmra.mxu0 %v359
    %v638 = vpop.f32.mrf.mxu0
    %v639 = vadd.f32 0.0, %v638
    %v640 = vpop.f32.mrf.mxu0
    %v641 = vpop.f32.mrf.mxu0
    %v642 = vadd.f32 0.0, %v641
    %v643 = vpop.f32.mrf.mxu0
    %644 = vmatprep.mubr.bf16.mxu0 0
    %645 = vmatmul.mubr.bf16.gmra.mxu0 %v362
    %v646 = vpop.f32.mrf.mxu0
    %v647 = vadd.f32 0.0, %v646
    %v648 = vpop.f32.mrf.mxu0
    %v649 = vpop.f32.mrf.mxu0
    %v650 = vadd.f32 0.0, %v649
    %v651 = vpop.f32.mrf.mxu0
    %652 = vdwg.mxu0
    %v653 = vmax.f32 %v399, 0.0
    %v654 = vmax.f32 %v402, 0.0
    %v655 = vmax.f32 %v407, 0.0
    %v656 = vmax.f32 %v410, 0.0
    %v657 = vmax.f32 %v415, 0.0
    %v658 = vmax.f32 %v418, 0.0
    %v659 = vmax.f32 %v423, 0.0
    %v660 = vmax.f32 %v426, 0.0
    %v661 = vmax.f32 %v431, 0.0
    %v662 = vmax.f32 %v434, 0.0
    %v663 = vmax.f32 %v439, 0.0
    %v664 = vmax.f32 %v442, 0.0
    %v665 = vmax.f32 %v447, 0.0
    %v666 = vmax.f32 %v450, 0.0
    %v667 = vmax.f32 %v455, 0.0
    %v668 = vmax.f32 %v458, 0.0
    %v669 = vmax.f32 %v463, 0.0
    %v670 = vmax.f32 %v466, 0.0
    %v671 = vmax.f32 %v471, 0.0
    %v672 = vmax.f32 %v474, 0.0
    %v673 = vmax.f32 %v479, 0.0
    %v674 = vmax.f32 %v482, 0.0
    %v675 = vmax.f32 %v487, 0.0
    %v676 = vmax.f32 %v490, 0.0
    %v677 = vmax.f32 %v495, 0.0
    %v678 = vmax.f32 %v498, 0.0
    %v679 = vmax.f32 %v503, 0.0
    %v680 = vmax.f32 %v506, 0.0
    %v681 = vmax.f32 %v511, 0.0
    %v682 = vmax.f32 %v514, 0.0
    %v683 = vmax.f32 %v519, 0.0
    %v684 = vmax.f32 %v522, 0.0
    %v685 = vmax.f32 %v527, 0.0
    %v686 = vmax.f32 %v530, 0.0
    %v687 = vmax.f32 %v535, 0.0
    %v688 = vmax.f32 %v538, 0.0
    %v689 = vmax.f32 %v543, 0.0
    %v690 = vmax.f32 %v546, 0.0
    %v691 = vmax.f32 %v551, 0.0
    %v692 = vmax.f32 %v554, 0.0
    %v693 = vmax.f32 %v559, 0.0
    %v694 = vmax.f32 %v562, 0.0
    %v695 = vmax.f32 %v567, 0.0
    %v696 = vmax.f32 %v570, 0.0
    %v697 = vmax.f32 %v575, 0.0
    %v698 = vmax.f32 %v578, 0.0
    %v699 = vmax.f32 %v583, 0.0
    %v700 = vmax.f32 %v586, 0.0
    %v701 = vmax.f32 %v591, 0.0
    %v702 = vmax.f32 %v594, 0.0
    %v703 = vmax.f32 %v599, 0.0
    %v704 = vmax.f32 %v602, 0.0
    %v705 = vmax.f32 %v607, 0.0
    %v706 = vmax.f32 %v610, 0.0
    %v707 = vmax.f32 %v615, 0.0
    %v708 = vmax.f32 %v618, 0.0
    %v709 = vmax.f32 %v623, 0.0
    %v710 = vmax.f32 %v626, 0.0
    %v711 = vmax.f32 %v631, 0.0
    %v712 = vmax.f32 %v634, 0.0
    %v713 = vmax.f32 %v639, 0.0
    %v714 = vmax.f32 %v642, 0.0
    %v715 = vmax.f32 %v647, 0.0
    %v716 = vmax.f32 %v650, 0.0
    %v717 = vld [vmem:[%s2] sm:$0xf]
    %v718 = vpack.c.bf16 %v654, %v653
    %v719 = vpack.c.bf16 %v656, %v655
    %v720 = vpack.c.bf16 %v658, %v657
    %v721 = vpack.c.bf16 %v660, %v659
    %v722 = vpack.c.bf16 %v662, %v661
    %v723 = vpack.c.bf16 %v664, %v663
    %v724 = vpack.c.bf16 %v666, %v665
    %v725 = vpack.c.bf16 %v668, %v667
    %v726 = vpack.c.bf16 %v670, %v669
    %v727 = vpack.c.bf16 %v672, %v671
    %v728 = vpack.c.bf16 %v674, %v673
    %v729 = vpack.c.bf16 %v676, %v675
    %v730 = vpack.c.bf16 %v678, %v677
    %v731 = vpack.c.bf16 %v680, %v679
    %v732 = vpack.c.bf16 %v682, %v681
    %v733 = vpack.c.bf16 %v684, %v683
    %v734 = vpack.c.bf16 %v686, %v685
    %v735 = vpack.c.bf16 %v688, %v687
    %v736 = vpack.c.bf16 %v690, %v689
    %v737 = vpack.c.bf16 %v692, %v691
    %v738 = vpack.c.bf16 %v694, %v693
    %v739 = vpack.c.bf16 %v696, %v695
    %v740 = vpack.c.bf16 %v698, %v697
    %v741 = vpack.c.bf16 %v700, %v699
    %v742 = vpack.c.bf16 %v702, %v701
    %v743 = vpack.c.bf16 %v704, %v703
    %v744 = vpack.c.bf16 %v706, %v705
    %v745 = vpack.c.bf16 %v708, %v707
    %v746 = vpack.c.bf16 %v710, %v709
    %v747 = vpack.c.bf16 %v712, %v711
    %v748 = vpack.c.bf16 %v714, %v713
    %v749 = vpack.c.bf16 %v716, %v715
    %v752 = vunpack.c.l.s4 1966171168
    %v753 = vunpack.c.0.s8 %v752
    %v754 = vlaneseq
    %v755 = vshrl.u32 %v754, 7
    %v756 = vsub.s32 %v753, %v755
    %v757 = vrot.slane %v717, %v756
    %v758 = vcombine.high %v757, %v757
    %v760 = vunpack.c.l.s4 1966171168
    %v761 = vunpack.c.0.s8 %v760
    %v762 = vlaneseq
    %v763 = vshrl.u32 %v762, 7
    %v764 = vsub.s32 %v761, %v763
    %v765 = vrot.slane %v757, %v764
    %v767 = vunpack.c.l.s4 1966171168
    %v768 = vunpack.c.0.s8 %v767
    %v769 = vlaneseq
    %v770 = vshrl.u32 %v769, 7
    %v771 = vsub.s32 %v768, %v770
    %v772 = vrot.slane %v758, %v771
    %v773 = vcombine.high %v765, %v765
    %v774 = vcombine.high %v772, %v772
    %779 = vmatprep.subr.bf16.mxu0 0
    %780 = vmatpush1.bf16.msra.mxu0 %v725
    %781 = vmatprep.subr.bf16.mxu0 0
    %782 = vmatpush1.bf16.msra.mxu0 %v724
    %783 = vmatprep.subr.bf16.mxu0 0
    %784 = vmatpush1.bf16.msra.mxu0 %v723
    %785 = vmatprep.subr.bf16.mxu0 0
    %786 = vmatpush1.bf16.msra.mxu0 %v722
    %787 = vmatprep.subr.bf16.mxu0 0
    %788 = vmatpush1.bf16.msra.mxu0 %v721
    %789 = vmatprep.subr.bf16.mxu0 0
    %790 = vmatpush1.bf16.msra.mxu0 %v720
    %791 = vmatprep.subr.bf16.mxu0 0
    %792 = vmatpush1.bf16.msra.mxu0 %v719
    %793 = vmatprep.subr.bf16.mxu0 0
    %794 = vmatpush1.bf16.msra.mxu0 %v718
    %795 = vmatprep.subr.bf16.mxu0 0
    %796 = vmatpush2.bf16.msra.mxu0 %v733
    %797 = vmatprep.subr.bf16.mxu0 0
    %798 = vmatpush2.bf16.msra.mxu0 %v732
    %799 = vmatprep.subr.bf16.mxu0 0
    %800 = vmatpush2.bf16.msra.mxu0 %v731
    %801 = vmatprep.subr.bf16.mxu0 0
    %802 = vmatpush2.bf16.msra.mxu0 %v730
    %803 = vmatprep.subr.bf16.mxu0 0
    %804 = vmatpush2.bf16.msra.mxu0 %v729
    %805 = vmatprep.subr.bf16.mxu0 0
    %806 = vmatpush2.bf16.msra.mxu0 %v728
    %807 = vmatprep.subr.bf16.mxu0 0
    %808 = vmatpush2.bf16.msra.mxu0 %v727
    %809 = vmatprep.subr.bf16.mxu0 0
    %810 = vmatpush2.bf16.msra.mxu0 %v726
    %811 = vmatprep.mubr.bf16.mxu0 %v772
    %812 = vmatmul.mubr.bf16.gmra.mxu0 %v765
    %v813 = vpop.f32.mrf.mxu0
    %v814 = vadd.f32 0.0, %v813
    %v815 = vpop.f32.mrf.mxu0
    %v816 = vpop.f32.mrf.mxu0
    %v817 = vpop.f32.mrf.mxu0
    %818 = vdwg.mxu0
    %819 = vmatprep.subr.bf16.mxu0 0
    %820 = vmatpush1.bf16.msra.mxu0 %v741
    %821 = vmatprep.subr.bf16.mxu0 0
    %822 = vmatpush1.bf16.msra.mxu0 %v740
    %823 = vmatprep.subr.bf16.mxu0 0
    %824 = vmatpush1.bf16.msra.mxu0 %v739
    %825 = vmatprep.subr.bf16.mxu0 0
    %826 = vmatpush1.bf16.msra.mxu0 %v738
    %827 = vmatprep.subr.bf16.mxu0 0
    %828 = vmatpush1.bf16.msra.mxu0 %v737
    %829 = vmatprep.subr.bf16.mxu0 0
    %830 = vmatpush1.bf16.msra.mxu0 %v736
    %831 = vmatprep.subr.bf16.mxu0 0
    %832 = vmatpush1.bf16.msra.mxu0 %v735
    %833 = vmatprep.subr.bf16.mxu0 0
    %834 = vmatpush1.bf16.msra.mxu0 %v734
    %835 = vmatprep.subr.bf16.mxu0 0
    %836 = vmatpush2.bf16.msra.mxu0 %v749
    %837 = vmatprep.subr.bf16.mxu0 0
    %838 = vmatpush2.bf16.msra.mxu0 %v748
    %839 = vmatprep.subr.bf16.mxu0 0
    %840 = vmatpush2.bf16.msra.mxu0 %v747
    %841 = vmatprep.subr.bf16.mxu0 0
    %842 = vmatpush2.bf16.msra.mxu0 %v746
    %843 = vmatprep.subr.bf16.mxu0 0
    %844 = vmatpush2.bf16.msra.mxu0 %v745
    %845 = vmatprep.subr.bf16.mxu0 0
    %846 = vmatpush2.bf16.msra.mxu0 %v744
    %847 = vmatprep.subr.bf16.mxu0 0
    %848 = vmatpush2.bf16.msra.mxu0 %v743
    %849 = vmatprep.subr.bf16.mxu0 0
    %850 = vmatpush2.bf16.msra.mxu0 %v742
    %851 = vmatprep.mubr.bf16.mxu0 %v774
    %852 = vmatmul.mubr.bf16.gmra.mxu0 %v773
    %v853 = vpop.f32.mrf.mxu0
    %v854 = vadd.f32 %v814, %v853
    %v855 = vpop.f32.mrf.mxu0
    %v856 = vpop.f32.mrf.mxu0
    %v857 = vpop.f32.mrf.mxu0
    %858 = vdwg.mxu0
    %v859 = vld [vmem:[%s1 + $0x18] sm:$0xf]
    %v860 = vld [vmem:[%s1 + $0x1c] sm:$0xf]
    %v861 = vld [vmem:[%s1 + $0x20] sm:$0xf]
    %v862 = vld [vmem:[%s1 + $0x24] sm:$0xf]
    %v863 = vpack.c.bf16 %v854, %v854
    %v868 = vunpack.c.l.b16 %v859
    %v869 = vunpack.c.l.b16 %v860
    %v870 = vunpack.c.l.b16 %v861
    %v871 = vunpack.c.l.b16 %v862
    %v872 = vpack.c.b16 %v869, %v868
    %v873 = vpack.c.b16 %v871, %v870
    %vm876 = vcmask 261120
    %v878 = vsel %vm876, %v863, 0
    %880 = vmatprep.subr.bf16.mxu0 0
    %881 = vmatpush1.bf16.msra.mxu0 0
    %882 = vmatprep.subr.bf16.mxu0 0
    %883 = vmatpush1.bf16.msra.mxu0 0
    %884 = vmatprep.subr.bf16.mxu0 0
    %885 = vmatpush1.bf16.msra.mxu0 0
    %886 = vmatprep.subr.bf16.mxu0 0
    %887 = vmatpush1.bf16.msra.mxu0 0
    %888 = vmatprep.subr.bf16.mxu0 0
    %889 = vmatpush1.bf16.msra.mxu0 0
    %890 = vmatprep.subr.bf16.mxu0 0
    %891 = vmatpush1.bf16.msra.mxu0 0
    %892 = vmatprep.subr.bf16.mxu0 0
    %893 = vmatpush1.bf16.msra.mxu0 %v873
    %894 = vmatprep.subr.bf16.mxu0 0
    %895 = vmatpush1.bf16.msra.mxu0 %v872
    %896 = vmatprep.subr.bf16.mxu0 0
    %897 = vmatpush2.bf16.msra.mxu0 0
    %898 = vmatprep.subr.bf16.mxu0 0
    %899 = vmatpush2.bf16.msra.mxu0 0
    %900 = vmatprep.subr.bf16.mxu0 0
    %901 = vmatpush2.bf16.msra.mxu0 0
    %902 = vmatprep.subr.bf16.mxu0 0
    %903 = vmatpush2.bf16.msra.mxu0 0
    %904 = vmatprep.subr.bf16.mxu0 0
    %905 = vmatpush2.bf16.msra.mxu0 0
    %906 = vmatprep.subr.bf16.mxu0 0
    %907 = vmatpush2.bf16.msra.mxu0 0
    %908 = vmatprep.subr.bf16.mxu0 0
    %909 = vmatpush2.bf16.msra.mxu0 0
    %910 = vmatprep.subr.bf16.mxu0 0
    %911 = vmatpush2.bf16.msra.mxu0 0
    %912 = vmatprep.mubr.bf16.mxu0 0
    %913 = vmatmul.mubr.bf16.gmra.mxu0 %v878
    %v914 = vpop.f32.mrf.mxu0
    %v915 = vadd.f32 0.0, %v914
    %v916 = vpop.f32.mrf.mxu0
    %v917 = vpop.f32.mrf.mxu0
    %v918 = vpop.f32.mrf.mxu0
    %919 = vdwg.mxu0
    %v920 = vmax.f32 %v915, 0.0
    %v921 = vld [vmem:[%s1 + $0x28] sm:$0xf]
    %v922 = vld [vmem:[%s1 + $0x2c] sm:$0xf]
    %v923 = vld [vmem:[%s1 + $0x30] sm:$0xf]
    %v924 = vld [vmem:[%s1 + $0x34] sm:$0xf]
    %v925 = vpack.c.bf16 %v920, %v920
    %v930 = vunpack.c.l.b16 %v921
    %v931 = vunpack.c.l.b16 %v922
    %v932 = vunpack.c.l.b16 %v923
    %v933 = vunpack.c.l.b16 %v924
    %v934 = vpack.c.b16 %v931, %v930
    %v935 = vpack.c.b16 %v933, %v932
    %v939 = vsel %vm876, %v925, 0
    %941 = vmatprep.subr.bf16.mxu0 0
    %942 = vmatpush1.bf16.msra.mxu0 0
    %943 = vmatprep.subr.bf16.mxu0 0
    %944 = vmatpush1.bf16.msra.mxu0 0
    %945 = vmatprep.subr.bf16.mxu0 0
    %946 = vmatpush1.bf16.msra.mxu0 0
    %947 = vmatprep.subr.bf16.mxu0 0
    %948 = vmatpush1.bf16.msra.mxu0 0
    %949 = vmatprep.subr.bf16.mxu0 0
    %950 = vmatpush1.bf16.msra.mxu0 0
    %951 = vmatprep.subr.bf16.mxu0 0
    %952 = vmatpush1.bf16.msra.mxu0 0
    %953 = vmatprep.subr.bf16.mxu0 0
    %954 = vmatpush1.bf16.msra.mxu0 %v935
    %955 = vmatprep.subr.bf16.mxu0 0
    %956 = vmatpush1.bf16.msra.mxu0 %v934
    %957 = vmatprep.subr.bf16.mxu0 0
    %958 = vmatpush2.bf16.msra.mxu0 0
    %959 = vmatprep.subr.bf16.mxu0 0
    %960 = vmatpush2.bf16.msra.mxu0 0
    %961 = vmatprep.subr.bf16.mxu0 0
    %962 = vmatpush2.bf16.msra.mxu0 0
    %963 = vmatprep.subr.bf16.mxu0 0
    %964 = vmatpush2.bf16.msra.mxu0 0
    %965 = vmatprep.subr.bf16.mxu0 0
    %966 = vmatpush2.bf16.msra.mxu0 0
    %967 = vmatprep.subr.bf16.mxu0 0
    %968 = vmatpush2.bf16.msra.mxu0 0
    %969 = vmatprep.subr.bf16.mxu0 0
    %970 = vmatpush2.bf16.msra.mxu0 0
    %971 = vmatprep.subr.bf16.mxu0 0
    %972 = vmatpush2.bf16.msra.mxu0 0
    %973 = vmatprep.mubr.bf16.mxu0 0
    %974 = vmatmul.mubr.bf16.gmra.mxu0 %v939
    %v975 = vpop.f32.mrf.mxu0
    %v976 = vadd.f32 0.0, %v975
    %v977 = vpop.f32.mrf.mxu0
    %v978 = vpop.f32.mrf.mxu0
    %v979 = vpop.f32.mrf.mxu0
    %980 = vdwg.mxu0
    %982 = vset.pattern.permute.xlu0 8
    %983 = vperm.xlu0 %982, %v976
    %v984 = vpop.permute.xlu0 %983
    %v986 = vmul.f32 %v984, %v976
    %vm987 = vcmask 58400
    %v988 = vsel %vm987, %v986, -inf
    %989 = vmax.xlane.f32.xlu0 %v988
    %v990 = vpop.xlane.xlu0 %989
    %v991 = vsub.f32 %v986, %v990
    %v992 = vmul.f32 %v991, 1.442695
    %v993 = vpow.pop %v992
    %994 = vrot.lane.b32.xlu0 %v976, 4
    %v995 = vpop.permute.xlu0 %994
    %v997 = vmul.f32 %v993, %v995
    %999 = vrot.lane.b32.xlu0 %v997, 124
    %v1000 = vpop.permute.xlu0 %999
    %vm1002 = vcmask 25600
    %v1003 = vsel %vm1002, %v1000, 0.0
    %1004 = vadd.xlane.f32.xlu0 %v1003
    %v1005 = vpop.xlane.xlu0 %1004
    %1007 = vrot.lane.b32.xlu0 %v993, 124
    %v1008 = vpop.permute.xlu0 %1007
    %v1010 = vsel %vm1002, %v1008, 0.0
    %1011 = vadd.xlane.f32.xlu0 %v1010
    %v1012 = vpop.xlane.xlu0 %1011
    %v1013 = vrcp.pop %v1012
    %v1014 = vmul.f32 %v1005, %v1013
    %1015 = vset.pattern.permute.xlu0 9
    %1016 = vperm.xlu0 %1015, %v976
    %v1017 = vpop.permute.xlu0 %1016
    %v1019 = vmul.f32 %v1017, %v976
    %v1020 = vsel %vm987, %v1019, -inf
    %1021 = vmax.xlane.f32.xlu0 %v1020
    %v1022 = vpop.xlane.xlu0 %1021
    %v1023 = vsub.f32 %v1019, %v1022
    %v1024 = vmul.f32 %v1023, 1.442695
    %v1025 = vpow.pop %v1024
    %v1026 = vmul.f32 %v1025, %v995
    %1028 = vrot.lane.b32.xlu0 %v1026, 124
    %v1029 = vpop.permute.xlu0 %1028
    %v1031 = vsel %vm1002, %v1029, 0.0
    %1032 = vadd.xlane.f32.xlu0 %v1031
    %v1033 = vpop.xlane.xlu0 %1032
    %1035 = vrot.lane.b32.xlu0 %v1025, 124
    %v1036 = vpop.permute.xlu0 %1035
    %v1038 = vsel %vm1002, %v1036, 0.0
    %1039 = vadd.xlane.f32.xlu0 %v1038
    %v1040 = vpop.xlane.xlu0 %1039
    %v1041 = vrcp.pop %v1040
    %v1042 = vmul.f32 %v1033, %v1041
    %1043 = vset.pattern.permute.xlu0 10
    %1044 = vperm.xlu0 %1043, %v976
    %v1045 = vpop.permute.xlu0 %1044
    %v1047 = vmul.f32 %v1045, %v976
    %v1048 = vsel %vm987, %v1047, -inf
    %1049 = vmax.xlane.f32.xlu0 %v1048
    %v1050 = vpop.xlane.xlu0 %1049
    %v1051 = vsub.f32 %v1047, %v1050
    %v1052 = vmul.f32 %v1051, 1.442695
    %v1053 = vpow.pop %v1052
    %v1054 = vmul.f32 %v1053, %v995
    %1056 = vrot.lane.b32.xlu0 %v1054, 124
    %v1057 = vpop.permute.xlu0 %1056
    %v1059 = vsel %vm1002, %v1057, 0.0
    %1060 = vadd.xlane.f32.xlu0 %v1059
    %v1061 = vpop.xlane.xlu0 %1060
    %1063 = vrot.lane.b32.xlu0 %v1053, 124
    %v1064 = vpop.permute.xlu0 %1063
    %v1066 = vsel %vm1002, %v1064, 0.0
    %1067 = vadd.xlane.f32.xlu0 %v1066
    %v1068 = vpop.xlane.xlu0 %1067
    %v1069 = vrcp.pop %v1068
    %v1070 = vmul.f32 %v1061, %v1069
    %1071 = vset.pattern.permute.xlu0 11
    %1072 = vperm.xlu0 %1071, %v976
    %v1073 = vpop.permute.xlu0 %1072
    %v1075 = vmul.f32 %v1073, %v976
    %v1076 = vsel %vm987, %v1075, -inf
    %1077 = vmax.xlane.f32.xlu0 %v1076
    %v1078 = vpop.xlane.xlu0 %1077
    %v1079 = vsub.f32 %v1075, %v1078
    %v1080 = vmul.f32 %v1079, 1.442695
    %v1081 = vpow.pop %v1080
    %v1082 = vmul.f32 %v1081, %v995
    %1084 = vrot.lane.b32.xlu0 %v1082, 124
    %v1085 = vpop.permute.xlu0 %1084
    %v1087 = vsel %vm1002, %v1085, 0.0
    %1088 = vadd.xlane.f32.xlu0 %v1087
    %v1089 = vpop.xlane.xlu0 %1088
    %1091 = vrot.lane.b32.xlu0 %v1081, 124
    %v1092 = vpop.permute.xlu0 %1091
    %v1094 = vsel %vm1002, %v1092, 0.0
    %1095 = vadd.xlane.f32.xlu0 %v1094
    %v1096 = vpop.xlane.xlu0 %1095
    %v1097 = vrcp.pop %v1096
    %v1098 = vmul.f32 %v1089, %v1097
    %vm1099 = vcmask 7168
    %v1100 = vsel %vm1099, %v1014, %v1042
    %vm1101 = vcmask 15360
    %v1102 = vsel %vm1101, %v1100, %v1070
    %vm1103 = vcmask 23552
    %v1104 = vsel %vm1103, %v1102, %v1098
    %v1105 = vld [vmem:[%s1 + $0x38] sm:$0x3]
    %v1106 = vpack.c.bf16 %v1104, %v1104
    %vm1107 = vcmask 31744
    %v1109 = vsel %vm1107, %v1106, 0
    %vm1111 = vcmask 1041408
    %v1113 = vsel %vm1111, %v1105, 0
    %1115 = vmatprep.subr.bf16.mxu0 0
    %1116 = vmatpush1.bf16.msra.mxu0 0
    %1117 = vmatprep.subr.bf16.mxu0 0
    %1118 = vmatpush1.bf16.msra.mxu0 0
    %1119 = vmatprep.subr.bf16.mxu0 0
    %1120 = vmatpush1.bf16.msra.mxu0 0
    %1121 = vmatprep.subr.bf16.mxu0 0
    %1122 = vmatpush1.bf16.msra.mxu0 0
    %1123 = vmatprep.subr.bf16.mxu0 0
    %1124 = vmatpush1.bf16.msra.mxu0 0
    %1125 = vmatprep.subr.bf16.mxu0 0
    %1126 = vmatpush1.bf16.msra.mxu0 0
    %1127 = vmatprep.subr.bf16.mxu0 0
    %1128 = vmatpush1.bf16.msra.mxu0 0
    %1129 = vmatprep.subr.bf16.mxu0 0
    %1130 = vmatpush1.bf16.msra.mxu0 %v1113
    %1131 = vmatprep.subr.bf16.mxu0 0
    %1132 = vmatpush2.bf16.msra.mxu0 0
    %1133 = vmatprep.subr.bf16.mxu0 0
    %1134 = vmatpush2.bf16.msra.mxu0 0
    %1135 = vmatprep.subr.bf16.mxu0 0
    %1136 = vmatpush2.bf16.msra.mxu0 0
    %1137 = vmatprep.subr.bf16.mxu0 0
    %1138 = vmatpush2.bf16.msra.mxu0 0
    %1139 = vmatprep.subr.bf16.mxu0 0
    %1140 = vmatpush2.bf16.msra.mxu0 0
    %1141 = vmatprep.subr.bf16.mxu0 0
    %1142 = vmatpush2.bf16.msra.mxu0 0
    %1143 = vmatprep.subr.bf16.mxu0 0
    %1144 = vmatpush2.bf16.msra.mxu0 0
    %1145 = vmatprep.subr.bf16.mxu0 0
    %1146 = vmatpush2.bf16.msra.mxu0 0
    %1147 = vmatprep.mubr.bf16.mxu0 0
    %1148 = vmatmul.mubr.bf16.gmra.mxu0 %v1109
    %v1149 = vpop.f32.mrf.mxu0
    %v1150 = vadd.f32 %v920, %v1149
    %v1151 = vpop.f32.mrf.mxu0
    %v1152 = vpop.f32.mrf.mxu0
    %v1153 = vpop.f32.mrf.mxu0
    %1154 = vdwg.mxu0
    %v1155 = vld [vmem:[%s3] sm:$0x3]
    %v1156 = vmul.f32 %v1150, %v1155
    %v1157 = vld [vmem:[%s1 + $0x40] sm:$0xf]
    %v1158 = vld [vmem:[%s1 + $0x44] sm:$0xf]
    %v1159 = vld [vmem:[%s1 + $0x48] sm:$0xf]
    %v1160 = vld [vmem:[%s1 + $0x4c] sm:$0xf]
    %v1161 = vpack.c.bf16 %v1156, %v1156
    %v1166 = vunpack.c.l.b16 %v1157
    %v1167 = vunpack.c.l.b16 %v1158
    %v1168 = vunpack.c.l.b16 %v1159
    %v1169 = vunpack.c.l.b16 %v1160
    %v1170 = vpack.c.b16 %v1167, %v1166
    %v1171 = vpack.c.b16 %v1169, %v1168
    %v1175 = vsel %vm876, %v1161, 0
    %1177 = vmatprep.subr.bf16.mxu0 0
    %1178 = vmatpush1.bf16.msra.mxu0 0
    %1179 = vmatprep.subr.bf16.mxu0 0
    %1180 = vmatpush1.bf16.msra.mxu0 0
    %1181 = vmatprep.subr.bf16.mxu0 0
    %1182 = vmatpush1.bf16.msra.mxu0 0
    %1183 = vmatprep.subr.bf16.mxu0 0
    %1184 = vmatpush1.bf16.msra.mxu0 0
    %1185 = vmatprep.subr.bf16.mxu0 0
    %1186 = vmatpush1.bf16.msra.mxu0 0
    %1187 = vmatprep.subr.bf16.mxu0 0
    %1188 = vmatpush1.bf16.msra.mxu0 0
    %1189 = vmatprep.subr.bf16.mxu0 0
    %1190 = vmatpush1.bf16.msra.mxu0 %v1171
    %1191 = vmatprep.subr.bf16.mxu0 0
    %1192 = vmatpush1.bf16.msra.mxu0 %v1170
    %1193 = vmatprep.subr.bf16.mxu0 0
    %1194 = vmatpush2.bf16.msra.mxu0 0
    %1195 = vmatprep.subr.bf16.mxu0 0
    %1196 = vmatpush2.bf16.msra.mxu0 0
    %1197 = vmatprep.subr.bf16.mxu0 0
    %1198 = vmatpush2.bf16.msra.mxu0 0
    %1199 = vmatprep.subr.bf16.mxu0 0
    %1200 = vmatpush2.bf16.msra.mxu0 0
    %1201 = vmatprep.subr.bf16.mxu0 0
    %1202 = vmatpush2.bf16.msra.mxu0 0
    %1203 = vmatprep.subr.bf16.mxu0 0
    %1204 = vmatpush2.bf16.msra.mxu0 0
    %1205 = vmatprep.subr.bf16.mxu0 0
    %1206 = vmatpush2.bf16.msra.mxu0 0
    %1207 = vmatprep.subr.bf16.mxu0 0
    %1208 = vmatpush2.bf16.msra.mxu0 0
    %1209 = vmatprep.mubr.bf16.mxu0 0
    %1210 = vmatmul.mubr.bf16.gmra.mxu0 %v1175
    %v1211 = vpop.f32.mrf.mxu0
    %v1212 = vadd.f32 0.0, %v1211
    %v1213 = vpop.f32.mrf.mxu0
    %v1214 = vpop.f32.mrf.mxu0
    %v1215 = vpop.f32.mrf.mxu0
    %1216 = vdwg.mxu0
    %1217 = vst [vmem:[#allocation2] sm:$0x3] %v1212
    // Predicated region
    $region18: #{atloc_forward.1} parent=1 // pred_check
      _
    $region19: #{atloc_forward.1} parent=1 // pred_check_branch
      %1219 = sbr.rel (0) target = $region21
    $region20: #{atloc_forward.1} parent=1 // pred_region
      %s1221 = ssub.s32 32, 32
      %1222 = vsyncadd [#allocation3], %s1221
      %s1224 = sshll.u32 [#allocation2], 4
      %s1225 = int_to_ptr.vmem [resolvable:$true] %s1224
      %1227 = dma.vmem_to_hbm [thread:$0]  %s1225, 32, %s4, [#allocation3]
    $region21: #{atloc_forward.1} parent=1 // pred_fallthru
      _
    // Predicated region
    $region22: #{atloc_forward.1} parent=1 // pred_check
      _
    $region23: #{atloc_forward.1} parent=1 // pred_check_branch
      %1229 = sbr.rel (0) target = $region25
    $region24: #{atloc_forward.1} parent=1 // pred_region
      %1230 = dma.done [#allocation3], 32
    $region25: #{atloc_forward.1} parent=1 // pred_fallthru
      _
    %1231 = vsyncpa [#allocation3], 1

</llo_original>
